<compile_context>
chip_gen: v7x
topology: tpu7x:2x2x1
jax: 0.10.0
libtpu: 0.0.40
codegen_flags: <defaults>
</compile_context>

<pallas_src>
import functools

import jax
import jax.numpy as jnp
from jax.experimental import pallas as pl
from jax.experimental.pallas import tpu as pltpu


_LANE = 128     # feature dims AND the node dim pad to this (lane-dense / MXU K-dim)
_SUBLANE = 8    # graph (row-only) dim pads to this


def _round_up(v, m):
    return (v + m - 1) // m * m


def _pad2d(x, rows, cols):
    return jnp.pad(x, ((0, rows - x.shape[0]), (0, cols - x.shape[1])))


def _tanh_exp(y):
    # TanhExp(y) = y * tanh(exp(y)). Clamp the exp argument so it never hits inf;
    # tanh(exp(20)) == 1.0 exactly in f32, so the clamp is numerically a no-op.
    return y * jnp.tanh(jnp.exp(jnp.minimum(y, 20.0)))


@functools.lru_cache(maxsize=1)
def _vmem_limit_bytes():
    """Per-generation VMEM budget: capacity minus 16 MiB headroom for Mosaic scratch."""
    try:
        cap = int(pltpu.get_tpu_info().vmem_capacity_bytes)
    except Exception:
        cap = 64 * 1024 * 1024
    return max(32 * 1024 * 1024, min(cap - 16 * 1024 * 1024, 112 * 1024 * 1024))


# ----------------------------------------------------------------------------
# Fused forward kernel: everything in VMEM, one launch, no grid.
#   refs = (a_ref, s_ref, x_ref, [w_ref, b_ref] * (n_gcn + len(lin_acts)), out_ref)
# ----------------------------------------------------------------------------
def _fused_forward_kernel(n_gcn, lin_acts, *refs):
    a_ref, s_ref, x_ref = refs[0], refs[1], refs[2]
    out_ref = refs[-1]
    wb = refs[3:-1]

    a = a_ref[...]                                   # bf16 [Np, Np]  normalized adjacency
    h = x_ref[...]                                   # bf16 [Np, Fp]  node features
    k = 0

    # --- GCN stack: TanhExp(A_hat @ (h @ W) + b) ---
    # Note: A and hw are cast to bf16 before the MXU; expect ~1e-2 relative drift
    # vs an f32 PyTorch reference (acceptable; keeps A's VMEM footprint halved).
    for _ in range(n_gcn):
        w = wb[k][...]                               # bf16 [Fin_p, Fout_p] (pre-transposed)
        b = wb[k + 1][...]                           # f32  [1, Fout_p]
        k += 2
        hw = jnp.dot(h, w, preferred_element_type=jnp.float32)
        # TODO(synk): split this matmul over node-row blocks on a leading "parallel"
        # grid axis so v7x's 2nd TensorCore is used (needs per-layer cross-core sync).
        y = jnp.dot(a, hw.astype(jnp.bfloat16), preferred_element_type=jnp.float32)
        y = _tanh_exp(y + b)                         # bias + activation in f32
        h = y.astype(jnp.bfloat16)

    # --- GraphGather: per-graph sum-pool as segment-matrix matmul ---
    # TODO(synk): GraphGather definition not shown; assumed sum-pool over each graph's nodes.
    g = jnp.dot(s_ref[...], h, preferred_element_type=jnp.float32)   # f32 [Gp, Hp]

    # --- Affine head: Linear (+ TanhExp except on the last layer) ---
    for act in lin_acts:
        w = wb[k][...]
        b = wb[k + 1][...]
        k += 2
        g = jnp.dot(g.astype(jnp.bfloat16), w, preferred_element_type=jnp.float32) + b
        if act:
            g = _tanh_exp(g)

    out_ref[...] = g.astype(out_ref.dtype)


# ----------------------------------------------------------------------------
# Glue (plain JAX): GCN normalization, segment matrix, parameter setup
# ----------------------------------------------------------------------------
def normalized_adjacency(edge_index, num_nodes):
    """A_hat = D^{-1/2} (A + I) D^{-1/2}, dense [N, N] (GCNConv default norm).

    Degree is computed from dst; this equals the symmetric norm only for undirected
    (both-directions) edge lists, matching GCNConv's usual usage.
    """
    src = jnp.concatenate([edge_index[0], jnp.arange(num_nodes)])
    dst = jnp.concatenate([edge_index[1], jnp.arange(num_nodes)])
    ones = jnp.ones_like(src, dtype=jnp.float32)
    deg = jnp.zeros((num_nodes,), jnp.float32).at[dst].add(ones)
    dinv = jnp.where(deg > 0.0, jax.lax.rsqrt(deg), 0.0)
    norm = dinv[src] * dinv[dst]
    a = jnp.zeros((num_nodes, num_nodes), jnp.float32).at[dst, src].add(norm)
    return a


def segment_matrix(feature_size_list, num_nodes):
    """S[g, n] = 1 if node n belongs to graph g; GraphGather == S @ x (sum-pool)."""
    seg = []
    for g, s in enumerate(feature_size_list):
        seg += [g] * s
    assert len(seg) == num_nodes, "nodes must be contiguous and ordered by graph id"
    seg = jnp.array(seg, dtype=jnp.int32)
    return jax.nn.one_hot(seg, len(feature_size_list), dtype=jnp.float32).T


def prepare_graph_operands(edge_index, feature_size_list, num_nodes):
    """Precompute padded A_hat / S ONCE per graph-batch structure (hoisted out of
    the jitted forward: these O(N^2) scatter/one-hot ops would otherwise dominate
    wall-clock and force recompiles keyed on feature_size_list)."""
    n_pad = _round_up(max(num_nodes, _LANE), _LANE)          # lane + MXU-K aligned
    g_pad = _round_up(max(len(feature_size_list), _SUBLANE), _SUBLANE)
    a = normalized_adjacency(edge_index, num_nodes)
    s = segment_matrix(feature_size_list, num_nodes)
    a_pad = _pad2d(a, n_pad, n_pad).astype(jnp.bfloat16)
    s_pad = _pad2d(s, g_pad, n_pad).astype(jnp.bfloat16)
    return jax.device_put(a_pad), jax.device_put(s_pad)


def init_linear(key, n_in, n_out, scale=0.1):
    kw, kb = jax.random.split(key)
    # Stored PRE-TRANSPOSED as [n_in, n_out] so the forward pass never transposes.
    w = scale * jax.random.normal(kw, (n_in, n_out), dtype=jnp.float32)
    b = scale * jax.random.normal(kb, (n_out,), dtype=jnp.float32)
    return w, b


def init_params(key, n_input, n_output, gc_hidden_size_list, affine_hidden_size_list):
    params = {"gcn_w": [], "gcn_b": [], "lin_w": [], "lin_b": []}
    dims = [n_input] + list(gc_hidden_size_list)
    for i in range(len(gc_hidden_size_list)):
        key, sub = jax.random.split(key)
        w, b = init_linear(sub, dims[i], dims[i + 1])
        params["gcn_w"].append(w)
        params["gcn_b"].append(b)
    # Affine head mirrors the module: hidden layers (act) + final Linear (no act).
    lin_dims = [gc_hidden_size_list[-1]] + list(affine_hidden_size_list) + [n_output]
    for i in range(len(lin_dims) - 1):
        key, sub = jax.random.split(key)
        w, b = init_linear(sub, lin_dims[i], lin_dims[i + 1])
        params["lin_w"].append(w)
        params["lin_b"].append(b)
    return params


# ----------------------------------------------------------------------------
# Forward pass: pad operands, launch ONE fused Pallas kernel (no grid, no
# phantom double-buffers — everything whole-array VMEM resident).
# ----------------------------------------------------------------------------
@functools.partial(jax.jit, static_argnames=("num_graphs",))
def graph_conv_model_forward(params, x, a_pad, s_pad, num_graphs):
    n_pad = a_pad.shape[0]
    g_pad = s_pad.shape[0]
    num_nodes, n_input = x.shape
    n_output = params["lin_w"][-1].shape[1]
    out_pad = _round_up(n_output, _LANE)

    x_pad = _pad2d(x.astype(jnp.float32), n_pad,
                   _round_up(n_input, _LANE)).astype(jnp.bfloat16)

    # Flatten + pad all weights/biases (weights bf16, biases f32) and build the
    # static cost estimate at the same time.
    wb_flat = []
    flops = 0
    transc = 0
    n_lin = len(params["lin_w"])
    for idx, (w, b) in enumerate(zip(params["gcn_w"] + params["lin_w"],
                                     params["gcn_b"] + params["lin_b"])):
        fin_p = _round_up(w.shape[0], _LANE)
        fout_p = _round_up(w.shape[1], _LANE)
        w_pad = _pad2d(w, fin_p, fout_p)
        b_pad = _pad2d(b.reshape(1, -1), 1, fout_p)
        wb_flat.append(w_pad.astype(jnp.bfloat16))
        wb_flat.append(b_pad.astype(jnp.float32))
        if idx < len(params["gcn_w"]):                       # GCN layer
            flops += 2 * n_pad * fin_p * fout_p              # h @ W
            flops += 2 * n_pad * n_pad * fout_p              # A_hat @ (hW)
            transc += 2 * n_pad * fout_p                     # exp + tanh
        else:                                                # affine layer
            flops += 2 * g_pad * fin_p * fout_p
            if idx - len(params["gcn_w"]) < n_lin - 1:
                transc += 2 * g_pad * fout_p
    flops += 2 * g_pad * n_pad * _round_up(params["gcn_w"][-1].shape[1], _LANE)  # gather

    n_gcn = len(params["gcn_w"])
    lin_acts = tuple([True] * (n_lin - 1) + [False])

    inputs = [a_pad, s_pad, x_pad] + wb_flat
    bytes_acc = sum(int(arr.size) * arr.dtype.itemsize for arr in inputs)
    bytes_acc += g_pad * out_pad * 4

    vmem_spec = pl.BlockSpec(memory_space=pltpu.MemorySpace.VMEM)

    out = pl.pallas_call(
        functools.partial(_fused_forward_kernel, n_gcn, lin_acts),
        out_shape=jax.ShapeDtypeStruct((g_pad, out_pad), jnp.float32),
        in_specs=[vmem_spec] * len(inputs),
        out_specs=vmem_spec,
        compiler_params=pltpu.CompilerParams(
            vmem_limit_bytes=_vmem_limit_bytes(),
        ),
        cost_estimate=pl.CostEstimate(
            flops=int(flops),
            transcendentals=int(transc),
            bytes_accessed=int(bytes_acc),
        ),
    )(*inputs)

    return out[:num_graphs, :n_output]


# ----------------------------------------------------------------------------
# Main
# ----------------------------------------------------------------------------
if __name__ == "__main__":
    key = jax.random.PRNGKey(0)

    n_input = 4
    n_output = 3
    gc_hidden_size_list = [32, 32]
    affine_hidden_size_list = [32, 16]

    # Two small graphs: 5 nodes + 3 nodes = 8 total nodes.
    feature_size_list = (5, 3)
    num_nodes = sum(feature_size_list)

    # Undirected edges (both directions listed): graph 0 ring over 0..4, graph 1 path 5-6-7.
    edges = [(0, 1), (1, 2), (2, 3), (3, 4), (4, 0), (5, 6), (6, 7)]
    src = [a for a, b in edges] + [b for a, b in edges]
    dst = [b for a, b in edges] + [a for a, b in edges]
    edge_index = jnp.array([src, dst], dtype=jnp.int32)

    key, kx, kp = jax.random.split(key, 3)
    x = jax.random.normal(kx, (num_nodes, n_input), dtype=jnp.float32)
    params = init_params(kp, n_input, n_output, gc_hidden_size_list, affine_hidden_size_list)

    # Graph-structure operands built once, outside the jitted forward.
    a_pad, s_pad = prepare_graph_operands(edge_index, feature_size_list, num_nodes)

    out = graph_conv_model_forward(params, x, a_pad, s_pad,
                                   num_graphs=len(feature_size_list))
    out = jax.block_until_ready(out)
    assert out.shape == (len(feature_size_list), n_output)
    assert bool(jnp.all(jnp.isfinite(out)))
    print("KERNEL_OK")
</pallas_src>

<mosaic_0001>
module attributes {stable_mosaic.version = 11 : i64} {
  func.func @_fused_forward_kernel(%arg0: memref<128x128xbf16, #tpu.memory_space<vmem>>, %arg1: memref<8x128xbf16, #tpu.memory_space<vmem>>, %arg2: memref<128x128xbf16, #tpu.memory_space<vmem>>, %arg3: memref<128x128xbf16, #tpu.memory_space<vmem>>, %arg4: memref<1x128xf32, #tpu.memory_space<vmem>>, %arg5: memref<128x128xbf16, #tpu.memory_space<vmem>>, %arg6: memref<1x128xf32, #tpu.memory_space<vmem>>, %arg7: memref<128x128xbf16, #tpu.memory_space<vmem>>, %arg8: memref<1x128xf32, #tpu.memory_space<vmem>>, %arg9: memref<128x128xbf16, #tpu.memory_space<vmem>>, %arg10: memref<1x128xf32, #tpu.memory_space<vmem>>, %arg11: memref<128x128xbf16, #tpu.memory_space<vmem>>, %arg12: memref<1x128xf32, #tpu.memory_space<vmem>>, %arg13: memref<8x128xf32, #tpu.memory_space<vmem>>) attributes {dimension_semantics = [], scalar_prefetch = 0 : i64, scratch_operands = 0 : i64, tpu.core_type = #tpu.core_type<tc>} {
    %c0 = arith.constant 0 : index
    %c0_0 = arith.constant 0 : index
    %0 = vector.load %arg0[%c0, %c0_0] : memref<128x128xbf16, #tpu.memory_space<vmem>>, vector<128x128xbf16>
    %c0_1 = arith.constant 0 : index
    %c0_2 = arith.constant 0 : index
    %1 = vector.load %arg2[%c0_1, %c0_2] : memref<128x128xbf16, #tpu.memory_space<vmem>>, vector<128x128xbf16>
    %c0_3 = arith.constant 0 : index
    %c0_4 = arith.constant 0 : index
    %2 = vector.load %arg3[%c0_3, %c0_4] : memref<128x128xbf16, #tpu.memory_space<vmem>>, vector<128x128xbf16>
    %c0_5 = arith.constant 0 : index
    %c0_6 = arith.constant 0 : index
    %3 = vector.load %arg4[%c0_5, %c0_6] : memref<1x128xf32, #tpu.memory_space<vmem>>, vector<1x128xf32>
    %cst = arith.constant dense<0.000000e+00> : vector<128x128xf32>
    %4 = tpu.matmul %1, %2, %cst {dimension_numbers = #tpu.dot_dimension_numbers<[1], [0], [0], [1], [0, 0, 1, 1], [], []>} : vector<128x128xbf16>, vector<128x128xbf16>, vector<128x128xf32> -> vector<128x128xf32>
    %5 = arith.truncf %4 : vector<128x128xf32> to vector<128x128xbf16>
    %cst_7 = arith.constant dense<0.000000e+00> : vector<128x128xf32>
    %6 = tpu.matmul %0, %5, %cst_7 {dimension_numbers = #tpu.dot_dimension_numbers<[1], [0], [0], [1], [0, 0, 1, 1], [], []>} : vector<128x128xbf16>, vector<128x128xbf16>, vector<128x128xf32> -> vector<128x128xf32>
    %7 = vector.broadcast %3 : vector<1x128xf32> to vector<128x128xf32>
    %8 = arith.addf %6, %7 : vector<128x128xf32>
    %cst_8 = arith.constant 2.000000e+01 : f32
    %9 = vector.broadcast %cst_8 : f32 to vector<128x128xf32>
    %10 = arith.minimumf %8, %9 : vector<128x128xf32>
    %11 = math.exp %10 : vector<128x128xf32>
    %12 = math.tanh %11 : vector<128x128xf32>
    %13 = arith.mulf %8, %12 : vector<128x128xf32>
    %14 = arith.truncf %13 : vector<128x128xf32> to vector<128x128xbf16>
    %c0_9 = arith.constant 0 : index
    %c0_10 = arith.constant 0 : index
    %15 = vector.load %arg5[%c0_9, %c0_10] : memref<128x128xbf16, #tpu.memory_space<vmem>>, vector<128x128xbf16>
    %c0_11 = arith.constant 0 : index
    %c0_12 = arith.constant 0 : index
    %16 = vector.load %arg6[%c0_11, %c0_12] : memref<1x128xf32, #tpu.memory_space<vmem>>, vector<1x128xf32>
    %cst_13 = arith.constant dense<0.000000e+00> : vector<128x128xf32>
    %17 = tpu.matmul %14, %15, %cst_13 {dimension_numbers = #tpu.dot_dimension_numbers<[1], [0], [0], [1], [0, 0, 1, 1], [], []>} : vector<128x128xbf16>, vector<128x128xbf16>, vector<128x128xf32> -> vector<128x128xf32>
    %18 = arith.truncf %17 : vector<128x128xf32> to vector<128x128xbf16>
    %cst_14 = arith.constant dense<0.000000e+00> : vector<128x128xf32>
    %19 = tpu.matmul %0, %18, %cst_14 {dimension_numbers = #tpu.dot_dimension_numbers<[1], [0], [0], [1], [0, 0, 1, 1], [], []>} : vector<128x128xbf16>, vector<128x128xbf16>, vector<128x128xf32> -> vector<128x128xf32>
    %20 = vector.broadcast %16 : vector<1x128xf32> to vector<128x128xf32>
    %21 = arith.addf %19, %20 : vector<128x128xf32>
    %cst_15 = arith.constant 2.000000e+01 : f32
    %22 = vector.broadcast %cst_15 : f32 to vector<128x128xf32>
    %23 = arith.minimumf %21, %22 : vector<128x128xf32>
    %24 = math.exp %23 : vector<128x128xf32>
    %25 = math.tanh %24 : vector<128x128xf32>
    %26 = arith.mulf %21, %25 : vector<128x128xf32>
    %27 = arith.truncf %26 : vector<128x128xf32> to vector<128x128xbf16>
    %c0_16 = arith.constant 0 : index
    %c0_17 = arith.constant 0 : index
    %28 = vector.load %arg1[%c0_16, %c0_17] : memref<8x128xbf16, #tpu.memory_space<vmem>>, vector<8x128xbf16>
    %cst_18 = arith.constant dense<0.000000e+00> : vector<8x128xf32>
    %29 = tpu.matmul %28, %27, %cst_18 {dimension_numbers = #tpu.dot_dimension_numbers<[1], [0], [0], [1], [0, 0, 1, 1], [], []>} : vector<8x128xbf16>, vector<128x128xbf16>, vector<8x128xf32> -> vector<8x128xf32>
    %c0_19 = arith.constant 0 : index
    %c0_20 = arith.constant 0 : index
    %30 = vector.load %arg7[%c0_19, %c0_20] : memref<128x128xbf16, #tpu.memory_space<vmem>>, vector<128x128xbf16>
    %c0_21 = arith.constant 0 : index
    %c0_22 = arith.constant 0 : index
    %31 = vector.load %arg8[%c0_21, %c0_22] : memref<1x128xf32, #tpu.memory_space<vmem>>, vector<1x128xf32>
    %32 = arith.truncf %29 : vector<8x128xf32> to vector<8x128xbf16>
    %cst_23 = arith.constant dense<0.000000e+00> : vector<8x128xf32>
    %33 = tpu.matmul %32, %30, %cst_23 {dimension_numbers = #tpu.dot_dimension_numbers<[1], [0], [0], [1], [0, 0, 1, 1], [], []>} : vector<8x128xbf16>, vector<128x128xbf16>, vector<8x128xf32> -> vector<8x128xf32>
    %34 = vector.broadcast %31 : vector<1x128xf32> to vector<8x128xf32>
    %35 = arith.addf %33, %34 : vector<8x128xf32>
    %cst_24 = arith.constant 2.000000e+01 : f32
    %36 = vector.broadcast %cst_24 : f32 to vector<8x128xf32>
    %37 = arith.minimumf %35, %36 : vector<8x128xf32>
    %38 = math.exp %37 : vector<8x128xf32>
    %39 = math.tanh %38 : vector<8x128xf32>
    %40 = arith.mulf %35, %39 : vector<8x128xf32>
    %c0_25 = arith.constant 0 : index
    %c0_26 = arith.constant 0 : index
    %41 = vector.load %arg9[%c0_25, %c0_26] : memref<128x128xbf16, #tpu.memory_space<vmem>>, vector<128x128xbf16>
    %c0_27 = arith.constant 0 : index
    %c0_28 = arith.constant 0 : index
    %42 = vector.load %arg10[%c0_27, %c0_28] : memref<1x128xf32, #tpu.memory_space<vmem>>, vector<1x128xf32>
    %43 = arith.truncf %40 : vector<8x128xf32> to vector<8x128xbf16>
    %cst_29 = arith.constant dense<0.000000e+00> : vector<8x128xf32>
    %44 = tpu.matmul %43, %41, %cst_29 {dimension_numbers = #tpu.dot_dimension_numbers<[1], [0], [0], [1], [0, 0, 1, 1], [], []>} : vector<8x128xbf16>, vector<128x128xbf16>, vector<8x128xf32> -> vector<8x128xf32>
    %45 = vector.broadcast %42 : vector<1x128xf32> to vector<8x128xf32>
    %46 = arith.addf %44, %45 : vector<8x128xf32>
    %cst_30 = arith.constant 2.000000e+01 : f32
    %47 = vector.broadcast %cst_30 : f32 to vector<8x128xf32>
    %48 = arith.minimumf %46, %47 : vector<8x128xf32>
    %49 = math.exp %48 : vector<8x128xf32>
    %50 = math.tanh %49 : vector<8x128xf32>
    %51 = arith.mulf %46, %50 : vector<8x128xf32>
    %c0_31 = arith.constant 0 : index
    %c0_32 = arith.constant 0 : index
    %52 = vector.load %arg11[%c0_31, %c0_32] : memref<128x128xbf16, #tpu.memory_space<vmem>>, vector<128x128xbf16>
    %c0_33 = arith.constant 0 : index
    %c0_34 = arith.constant 0 : index
    %53 = vector.load %arg12[%c0_33, %c0_34] : memref<1x128xf32, #tpu.memory_space<vmem>>, vector<1x128xf32>
    %54 = arith.truncf %51 : vector<8x128xf32> to vector<8x128xbf16>
    %cst_35 = arith.constant dense<0.000000e+00> : vector<8x128xf32>
    %55 = tpu.matmul %54, %52, %cst_35 {dimension_numbers = #tpu.dot_dimension_numbers<[1], [0], [0], [1], [0, 0, 1, 1], [], []>} : vector<8x128xbf16>, vector<128x128xbf16>, vector<8x128xf32> -> vector<8x128xf32>
    %56 = vector.broadcast %53 : vector<1x128xf32> to vector<8x128xf32>
    %57 = arith.addf %55, %56 : vector<8x128xf32>
    %c0_36 = arith.constant 0 : index
    %c0_37 = arith.constant 0 : index
    %58 = vector.load %arg13[%c0_36, %c0_37] : memref<8x128xf32, #tpu.memory_space<vmem>>, vector<8x128xf32>
    tpu.vector_store %arg13[%c0_36, %c0_37], %57 {strides = array<i32>} : memref<8x128xf32, #tpu.memory_space<vmem>>, vector<8x128xf32>,
    return
  }
}

</mosaic_0001>

<llo_original>
// kernel: graph_conv_model_forward.1
$region0: #{graph_conv_model_forward.1}
  #allocation0 [shape = 'u32[]', space=smem, size = 0x4, offset = 0x4, fixed_abs, tag = 'smem constant byte address 0x4 - core index']
  #allocation1 [shape = 'u32[144,128]{1,0:T(1,128)}', space=vmem, size = 0x12000, scoped, tag = 'internal scratch']
  %s0 = inlined_call_operand.vmem [shape: bf16[128,128], index: 0, kind: input, shape index: {}]
  %s1 = inlined_call_operand.vmem [shape: bf16[8,128], index: 1, kind: input, shape index: {}]
  %s2 = inlined_call_operand.vmem [shape: bf16[128,128], index: 2, kind: input, shape index: {}]
  %s3 = inlined_call_operand.vmem [shape: bf16[128,128], index: 3, kind: input, shape index: {}]
  %s4 = inlined_call_operand.vmem [shape: f32[1,128], index: 4, kind: input, shape index: {}]
  %s5 = inlined_call_operand.vmem [shape: bf16[128,128], index: 5, kind: input, shape index: {}]
  %s6 = inlined_call_operand.vmem [shape: f32[1,128], index: 6, kind: input, shape index: {}]
  %s7 = inlined_call_operand.vmem [shape: bf16[128,128], index: 7, kind: input, shape index: {}]
  %s8 = inlined_call_operand.vmem [shape: f32[1,128], index: 8, kind: input, shape index: {}]
  %s9 = inlined_call_operand.vmem [shape: bf16[128,128], index: 9, kind: input, shape index: {}]
  %s10 = inlined_call_operand.vmem [shape: f32[1,128], index: 10, kind: input, shape index: {}]
  %s11 = inlined_call_operand.vmem [shape: bf16[128,128], index: 11, kind: input, shape index: {}]
  %s12 = inlined_call_operand.vmem [shape: f32[1,128], index: 12, kind: input, shape index: {}]
  %s13 = inlined_call_operand.vmem [shape: f32[8,128], index: 13, kind: output, shape index: {}]
  %s14 = sld [smem:[#allocation0]]
  $region62: #{graph_conv_model_forward.1} parent=0
    _
  %s16 = ssub.s32 1, %s14
  %s17 = scalar_select 0, %s16, %s14
  // Predicated region
  $region2: #{graph_conv_model_forward.1} parent=0 // pred_check
    _
  $region3: #{graph_conv_model_forward.1} parent=0 // pred_check_branch
    %19 = sbr.rel (0) target = $region5
  $region4: #{graph_conv_model_forward.1} parent=0 // pred_region
    _
  $region5: #{graph_conv_model_forward.1} parent=0 // pred_fallthru
    _
  // Predicated region
  $region6: #{graph_conv_model_forward.1} parent=0 // pred_check
    _
  $region7: #{graph_conv_model_forward.1} parent=0 // pred_check_branch
    %21 = sbr.rel (0) target = $region9
  $region8: #{graph_conv_model_forward.1} parent=0 // pred_region
    _
  $region9: #{graph_conv_model_forward.1} parent=0 // pred_fallthru
    _
  // Predicated region
  $region10: #{graph_conv_model_forward.1} parent=0 // pred_check
    _
  $region11: #{graph_conv_model_forward.1} parent=0 // pred_check_branch
    %23 = sbr.rel (0) target = $region13
  $region12: #{graph_conv_model_forward.1} parent=0 // pred_region
    _
  $region13: #{graph_conv_model_forward.1} parent=0 // pred_fallthru
    _
  // Predicated region
  $region14: #{graph_conv_model_forward.1} parent=0 // pred_check
    _
  $region15: #{graph_conv_model_forward.1} parent=0 // pred_check_branch
    %25 = sbr.rel (0) target = $region17
  $region16: #{graph_conv_model_forward.1} parent=0 // pred_region
    _
  $region17: #{graph_conv_model_forward.1} parent=0 // pred_fallthru
    _
  // Predicated region
  $region18: #{graph_conv_model_forward.1} parent=0 // pred_check
    _
  $region19: #{graph_conv_model_forward.1} parent=0 // pred_check_branch
    %27 = sbr.rel (0) target = $region21
  $region20: #{graph_conv_model_forward.1} parent=0 // pred_region
    _
  $region21: #{graph_conv_model_forward.1} parent=0 // pred_fallthru
    _
  // Predicated region
  $region22: #{graph_conv_model_forward.1} parent=0 // pred_check
    _
  $region23: #{graph_conv_model_forward.1} parent=0 // pred_check_branch
    %29 = sbr.rel (0) target = $region25
  $region24: #{graph_conv_model_forward.1} parent=0 // pred_region
    _
  $region25: #{graph_conv_model_forward.1} parent=0 // pred_fallthru
    _
  // Predicated region
  $region26: #{graph_conv_model_forward.1} parent=0 // pred_check
    _
  $region27: #{graph_conv_model_forward.1} parent=0 // pred_check_branch
    %31 = sbr.rel (0) target = $region29
  $region28: #{graph_conv_model_forward.1} parent=0 // pred_region
    _
  $region29: #{graph_conv_model_forward.1} parent=0 // pred_fallthru
    _
  // Predicated region
  $region30: #{graph_conv_model_forward.1} parent=0 // pred_check
    _
  $region31: #{graph_conv_model_forward.1} parent=0 // pred_check_branch
    %33 = sbr.rel (0) target = $region33
  $region32: #{graph_conv_model_forward.1} parent=0 // pred_region
    _
  $region33: #{graph_conv_model_forward.1} parent=0 // pred_fallthru
    _
  // Predicated region
  $region34: #{graph_conv_model_forward.1} parent=0 // pred_check
    _
  $region35: #{graph_conv_model_forward.1} parent=0 // pred_check_branch
    %35 = sbr.rel (0) target = $region37
  $region36: #{graph_conv_model_forward.1} parent=0 // pred_region
    _
  $region37: #{graph_conv_model_forward.1} parent=0 // pred_fallthru
    _
  // Predicated region
  $region38: #{graph_conv_model_forward.1} parent=0 // pred_check
    _
  $region39: #{graph_conv_model_forward.1} parent=0 // pred_check_branch
    %37 = sbr.rel (0) target = $region41
  $region40: #{graph_conv_model_forward.1} parent=0 // pred_region
    _
  $region41: #{graph_conv_model_forward.1} parent=0 // pred_fallthru
    _
  // Predicated region
  $region42: #{graph_conv_model_forward.1} parent=0 // pred_check
    _
  $region43: #{graph_conv_model_forward.1} parent=0 // pred_check_branch
    %39 = sbr.rel (0) target = $region45
  $region44: #{graph_conv_model_forward.1} parent=0 // pred_region
    _
  $region45: #{graph_conv_model_forward.1} parent=0 // pred_fallthru
    _
  // Predicated region
  $region46: #{graph_conv_model_forward.1} parent=0 // pred_check
    _
  $region47: #{graph_conv_model_forward.1} parent=0 // pred_check_branch
    %41 = sbr.rel (0) target = $region49
  $region48: #{graph_conv_model_forward.1} parent=0 // pred_region
    _
  $region49: #{graph_conv_model_forward.1} parent=0 // pred_fallthru
    _
  // Predicated region
  $region50: #{graph_conv_model_forward.1} parent=0 // pred_check
    _
  $region51: #{graph_conv_model_forward.1} parent=0 // pred_check_branch
    %43 = sbr.rel (0) target = $region53
  $region52: #{graph_conv_model_forward.1} parent=0 // pred_region
    _
  $region53: #{graph_conv_model_forward.1} parent=0 // pred_fallthru
    _
  %v45 = vld [vmem:[%s0] sm:$0xf]
  %v46 = vld [vmem:[%s0 + $0x4] sm:$0xf]
  %v47 = vld [vmem:[%s0 + $0x8] sm:$0xf]
  %v48 = vld [vmem:[%s0 + $0xc] sm:$0xf]
  %v49 = vld [vmem:[%s0 + $0x10] sm:$0xf]
  %v50 = vld [vmem:[%s0 + $0x14] sm:$0xf]
  %v51 = vld [vmem:[%s0 + $0x18] sm:$0xf]
  %v52 = vld [vmem:[%s0 + $0x1c] sm:$0xf]
  %v53 = vld [vmem:[%s0 + $0x20] sm:$0xf]
  %v54 = vld [vmem:[%s0 + $0x24] sm:$0xf]
  %v55 = vld [vmem:[%s0 + $0x28] sm:$0xf]
  %v56 = vld [vmem:[%s0 + $0x2c] sm:$0xf]
  %v57 = vld [vmem:[%s0 + $0x30] sm:$0xf]
  %v58 = vld [vmem:[%s0 + $0x34] sm:$0xf]
  %v59 = vld [vmem:[%s0 + $0x38] sm:$0xf]
  %v60 = vld [vmem:[%s0 + $0x3c] sm:$0xf]
  %v61 = vld [vmem:[%s2] sm:$0xf]
  %v62 = vld [vmem:[%s2 + $0x4] sm:$0xf]
  %v63 = vld [vmem:[%s2 + $0x8] sm:$0xf]
  %v64 = vld [vmem:[%s2 + $0xc] sm:$0xf]
  %v65 = vld [vmem:[%s2 + $0x10] sm:$0xf]
  %v66 = vld [vmem:[%s2 + $0x14] sm:$0xf]
  %v67 = vld [vmem:[%s2 + $0x18] sm:$0xf]
  %v68 = vld [vmem:[%s2 + $0x1c] sm:$0xf]
  %v69 = vld [vmem:[%s2 + $0x20] sm:$0xf]
  %v70 = vld [vmem:[%s2 + $0x24] sm:$0xf]
  %v71 = vld [vmem:[%s2 + $0x28] sm:$0xf]
  %v72 = vld [vmem:[%s2 + $0x2c] sm:$0xf]
  %v73 = vld [vmem:[%s2 + $0x30] sm:$0xf]
  %v74 = vld [vmem:[%s2 + $0x34] sm:$0xf]
  %v75 = vld [vmem:[%s2 + $0x38] sm:$0xf]
  %v76 = vld [vmem:[%s2 + $0x3c] sm:$0xf]
  %v77 = vld [vmem:[%s3] sm:$0xf]
  %v78 = vld [vmem:[%s3 + $0x4] sm:$0xf]
  %v79 = vld [vmem:[%s3 + $0x8] sm:$0xf]
  %v80 = vld [vmem:[%s3 + $0xc] sm:$0xf]
  %v81 = vld [vmem:[%s3 + $0x10] sm:$0xf]
  %v82 = vld [vmem:[%s3 + $0x14] sm:$0xf]
  %v83 = vld [vmem:[%s3 + $0x18] sm:$0xf]
  %v84 = vld [vmem:[%s3 + $0x1c] sm:$0xf]
  %v85 = vld [vmem:[%s3 + $0x20] sm:$0xf]
  %v86 = vld [vmem:[%s3 + $0x24] sm:$0xf]
  %v87 = vld [vmem:[%s3 + $0x28] sm:$0xf]
  %v88 = vld [vmem:[%s3 + $0x2c] sm:$0xf]
  %v89 = vld [vmem:[%s3 + $0x30] sm:$0xf]
  %v90 = vld [vmem:[%s3 + $0x34] sm:$0xf]
  %v91 = vld [vmem:[%s3 + $0x38] sm:$0xf]
  %v92 = vld [vmem:[%s3 + $0x3c] sm:$0xf]
  %v93 = vld [vmem:[%s4] sm:$0x1]
  %v110 = vunpack.c.l.b16 %v61
  %v111 = vunpack.c.l.b16 %v62
  %v112 = vunpack.c.l.b16 %v63
  %v113 = vunpack.c.l.b16 %v64
  %v114 = vunpack.c.l.b16 %v65
  %v115 = vunpack.c.l.b16 %v66
  %v116 = vunpack.c.l.b16 %v67
  %v117 = vunpack.c.l.b16 %v68
  %v118 = vunpack.c.l.b16 %v69
  %v119 = vunpack.c.l.b16 %v70
  %v120 = vunpack.c.l.b16 %v71
  %v121 = vunpack.c.l.b16 %v72
  %v122 = vunpack.c.l.b16 %v73
  %v123 = vunpack.c.l.b16 %v74
  %v124 = vunpack.c.l.b16 %v75
  %v125 = vunpack.c.l.b16 %v76
  %v126 = vpack.c.b16 %v111, %v110
  %v127 = vpack.c.b16 %v113, %v112
  %v128 = vpack.c.b16 %v115, %v114
  %v129 = vpack.c.b16 %v117, %v116
  %v130 = vpack.c.b16 %v119, %v118
  %v131 = vpack.c.b16 %v121, %v120
  %v132 = vpack.c.b16 %v123, %v122
  %v133 = vpack.c.b16 %v125, %v124
  %v158 = vunpack.c.l.b16 %v77
  %v159 = vunpack.c.l.b16 %v78
  %v160 = vunpack.c.l.b16 %v79
  %v161 = vunpack.c.l.b16 %v80
  %v162 = vunpack.c.l.b16 %v81
  %v163 = vunpack.c.l.b16 %v82
  %v164 = vunpack.c.l.b16 %v83
  %v165 = vunpack.c.l.b16 %v84
  %v166 = vunpack.c.l.b16 %v85
  %v167 = vunpack.c.l.b16 %v86
  %v168 = vunpack.c.l.b16 %v87
  %v169 = vunpack.c.l.b16 %v88
  %v170 = vunpack.c.l.b16 %v89
  %v171 = vunpack.c.l.b16 %v90
  %v172 = vunpack.c.l.b16 %v91
  %v173 = vunpack.c.l.b16 %v92
  %v174 = vpack.c.b16 %v159, %v158
  %v175 = vpack.c.b16 %v161, %v160
  %v176 = vpack.c.b16 %v163, %v162
  %v177 = vpack.c.b16 %v165, %v164
  %v178 = vpack.c.b16 %v167, %v166
  %v179 = vpack.c.b16 %v169, %v168
  %v180 = vpack.c.b16 %v171, %v170
  %v181 = vpack.c.b16 %v173, %v172
  %190 = vmatprep.subr.bf16.mxu0 0
  %191 = vmatpush1.bf16.msra.mxu0 %v174
  %192 = vmatprep.subr.bf16.mxu0 0
  %193 = vmatpush1.bf16.msra.mxu0 %v175
  %194 = vmatprep.subr.bf16.mxu0 0
  %195 = vmatpush1.bf16.msra.mxu0 %v176
  %196 = vmatprep.subr.bf16.mxu0 0
  %197 = vmatpush1.bf16.msra.mxu0 %v177
  %198 = vmatprep.subr.bf16.mxu0 0
  %199 = vmatpush1.bf16.msra.mxu0 %v178
  %200 = vmatprep.subr.bf16.mxu0 0
  %201 = vmatpush1.bf16.msra.mxu0 %v179
  %202 = vmatprep.subr.bf16.mxu0 0
  %203 = vmatpush1.bf16.msra.mxu0 %v180
  %204 = vmatprep.subr.bf16.mxu0 0
  %205 = vmatpush1.bf16.msra.mxu0 %v181
  %206 = vmatprep.subr.bf16.mxu0 0
  %207 = vmatpush1.bf16.msra.mxu0 0
  %208 = vmatprep.subr.bf16.mxu0 0
  %209 = vmatpush1.bf16.msra.mxu0 0
  %210 = vmatprep.subr.bf16.mxu0 0
  %211 = vmatpush1.bf16.msra.mxu0 0
  %212 = vmatprep.subr.bf16.mxu0 0
  %213 = vmatpush1.bf16.msra.mxu0 0
  %214 = vmatprep.subr.bf16.mxu0 0
  %215 = vmatpush1.bf16.msra.mxu0 0
  %216 = vmatprep.subr.bf16.mxu0 0
  %217 = vmatpush1.bf16.msra.mxu0 0
  %218 = vmatprep.subr.bf16.mxu0 0
  %219 = vmatpush1.bf16.msra.mxu0 0
  %220 = vmatprep.subr.bf16.mxu0 0
  %221 = vmatpush1.bf16.msra.mxu0 0
  %222 = vmatprep.mubr.bf16.mxu0 0
  %223 = vmatmul.mubr.bf16.gmra.mrb[0].mxu0 %v126
  %v224 = vpop.f32.mrb[0].mxu0
  %v225 = vadd.f32 0.0, %v224
  %v226 = vpop.f32.mrb[0].mxu0
  %v227 = vpop.f32.mrb[0].mxu0
  %v228 = vadd.f32 0.0, %v227
  %v229 = vpop.f32.mrb[0].mxu0
  %230 = vmatprep.mubr.bf16.mxu0 0
  %231 = vmatmul.mubr.bf16.gmra.mrb[0].mxu0 %v127
  %v232 = vpop.f32.mrb[0].mxu0
  %v233 = vadd.f32 0.0, %v232
  %v234 = vpop.f32.mrb[0].mxu0
  %v235 = vpop.f32.mrb[0].mxu0
  %v236 = vadd.f32 0.0, %v235
  %v237 = vpop.f32.mrb[0].mxu0
  %238 = vmatprep.mubr.bf16.mxu0 0
  %239 = vmatmul.mubr.bf16.gmra.mrb[0].mxu0 %v128
  %v240 = vpop.f32.mrb[0].mxu0
  %v241 = vadd.f32 0.0, %v240
  %v242 = vpop.f32.mrb[0].mxu0
  %v243 = vpop.f32.mrb[0].mxu0
  %v244 = vadd.f32 0.0, %v243
  %v245 = vpop.f32.mrb[0].mxu0
  %246 = vmatprep.mubr.bf16.mxu0 0
  %247 = vmatmul.mubr.bf16.gmra.mrb[0].mxu0 %v129
  %v248 = vpop.f32.mrb[0].mxu0
  %v249 = vadd.f32 0.0, %v248
  %v250 = vpop.f32.mrb[0].mxu0
  %v251 = vpop.f32.mrb[0].mxu0
  %v252 = vadd.f32 0.0, %v251
  %v253 = vpop.f32.mrb[0].mxu0
  %254 = vmatprep.mubr.bf16.mxu0 0
  %255 = vmatmul.mubr.bf16.gmra.mrb[0].mxu0 %v130
  %v256 = vpop.f32.mrb[0].mxu0
  %v257 = vadd.f32 0.0, %v256
  %v258 = vpop.f32.mrb[0].mxu0
  %v259 = vpop.f32.mrb[0].mxu0
  %v260 = vadd.f32 0.0, %v259
  %v261 = vpop.f32.mrb[0].mxu0
  %262 = vmatprep.mubr.bf16.mxu0 0
  %263 = vmatmul.mubr.bf16.gmra.mrb[0].mxu0 %v131
  %v264 = vpop.f32.mrb[0].mxu0
  %v265 = vadd.f32 0.0, %v264
  %v266 = vpop.f32.mrb[0].mxu0
  %v267 = vpop.f32.mrb[0].mxu0
  %v268 = vadd.f32 0.0, %v267
  %v269 = vpop.f32.mrb[0].mxu0
  %270 = vmatprep.mubr.bf16.mxu0 0
  %271 = vmatmul.mubr.bf16.gmra.mrb[0].mxu0 %v132
  %v272 = vpop.f32.mrb[0].mxu0
  %v273 = vadd.f32 0.0, %v272
  %v274 = vpop.f32.mrb[0].mxu0
  %v275 = vpop.f32.mrb[0].mxu0
  %v276 = vadd.f32 0.0, %v275
  %v277 = vpop.f32.mrb[0].mxu0
  %278 = vmatprep.mubr.bf16.mxu0 0
  %279 = vmatmul.mubr.bf16.gmra.mrb[0].mxu0 %v133
  %v280 = vpop.f32.mrb[0].mxu0
  %v281 = vadd.f32 0.0, %v280
  %v282 = vpop.f32.mrb[0].mxu0
  %v283 = vpop.f32.mrb[0].mxu0
  %v284 = vadd.f32 0.0, %v283
  %v285 = vpop.f32.mrb[0].mxu0
  %286 = vdwg.mxu0
  %v287 = vpack.c.bf16 %v228, %v225
  %v288 = vpack.c.bf16 %v236, %v233
  %v289 = vpack.c.bf16 %v244, %v241
  %v290 = vpack.c.bf16 %v252, %v249
  %v291 = vpack.c.bf16 %v260, %v257
  %v292 = vpack.c.bf16 %v268, %v265
  %v293 = vpack.c.bf16 %v276, %v273
  %v294 = vpack.c.bf16 %v284, %v281
  %v296 = vlaneseq
  %v297 = vshrl.u32 %v296, 7
  %v298 = vsub.s32 0, %v297
  %v299 = vrot.slane %v93, %v298
  %v317 = vunpack.c.l.b16 %v45
  %v318 = vunpack.c.l.b16 %v46
  %v319 = vunpack.c.l.b16 %v47
  %v320 = vunpack.c.l.b16 %v48
  %v321 = vunpack.c.l.b16 %v49
  %v322 = vunpack.c.l.b16 %v50
  %v323 = vunpack.c.l.b16 %v51
  %v324 = vunpack.c.l.b16 %v52
  %v325 = vunpack.c.l.b16 %v53
  %v326 = vunpack.c.l.b16 %v54
  %v327 = vunpack.c.l.b16 %v55
  %v328 = vunpack.c.l.b16 %v56
  %v329 = vunpack.c.l.b16 %v57
  %v330 = vunpack.c.l.b16 %v58
  %v331 = vunpack.c.l.b16 %v59
  %v332 = vunpack.c.l.b16 %v60
  %v333 = vpack.c.b16 %v318, %v317
  %v334 = vpack.c.b16 %v320, %v319
  %v335 = vpack.c.b16 %v322, %v321
  %v336 = vpack.c.b16 %v324, %v323
  %v337 = vpack.c.b16 %v326, %v325
  %v338 = vpack.c.b16 %v328, %v327
  %v339 = vpack.c.b16 %v330, %v329
  %v340 = vpack.c.b16 %v332, %v331
  %349 = vmatprep.subr.bf16.mxu0 0
  %350 = vmatpush1.bf16.msra.mxu0 %v287
  %351 = vmatprep.subr.bf16.mxu0 0
  %352 = vmatpush1.bf16.msra.mxu0 %v288
  %353 = vmatprep.subr.bf16.mxu0 0
  %354 = vmatpush1.bf16.msra.mxu0 %v289
  %355 = vmatprep.subr.bf16.mxu0 0
  %356 = vmatpush1.bf16.msra.mxu0 %v290
  %357 = vmatprep.subr.bf16.mxu0 0
  %358 = vmatpush1.bf16.msra.mxu0 %v291
  %359 = vmatprep.subr.bf16.mxu0 0
  %360 = vmatpush1.bf16.msra.mxu0 %v292
  %361 = vmatprep.subr.bf16.mxu0 0
  %362 = vmatpush1.bf16.msra.mxu0 %v293
  %363 = vmatprep.subr.bf16.mxu0 0
  %364 = vmatpush1.bf16.msra.mxu0 %v294
  %365 = vmatprep.subr.bf16.mxu0 0
  %366 = vmatpush1.bf16.msra.mxu0 0
  %367 = vmatprep.subr.bf16.mxu0 0
  %368 = vmatpush1.bf16.msra.mxu0 0
  %369 = vmatprep.subr.bf16.mxu0 0
  %370 = vmatpush1.bf16.msra.mxu0 0
  %371 = vmatprep.subr.bf16.mxu0 0
  %372 = vmatpush1.bf16.msra.mxu0 0
  %373 = vmatprep.subr.bf16.mxu0 0
  %374 = vmatpush1.bf16.msra.mxu0 0
  %375 = vmatprep.subr.bf16.mxu0 0
  %376 = vmatpush1.bf16.msra.mxu0 0
  %377 = vmatprep.subr.bf16.mxu0 0
  %378 = vmatpush1.bf16.msra.mxu0 0
  %379 = vmatprep.subr.bf16.mxu0 0
  %380 = vmatpush1.bf16.msra.mxu0 0
  %381 = vmatprep.mubr.bf16.mxu0 0
  %382 = vmatmul.mubr.bf16.gmra.mrb[0].mxu0 %v333
  %v383 = vpop.f32.mrb[0].mxu0
  %v384 = vadd.f32 %v299, %v383
  %v385 = vpop.f32.mrb[0].mxu0
  %v386 = vpop.f32.mrb[0].mxu0
  %v387 = vadd.f32 %v299, %v386
  %v388 = vpop.f32.mrb[0].mxu0
  %389 = vmatprep.mubr.bf16.mxu0 0
  %390 = vmatmul.mubr.bf16.gmra.mrb[0].mxu0 %v334
  %v391 = vpop.f32.mrb[0].mxu0
  %v392 = vadd.f32 %v299, %v391
  %v393 = vpop.f32.mrb[0].mxu0
  %v394 = vpop.f32.mrb[0].mxu0
  %v395 = vadd.f32 %v299, %v394
  %v396 = vpop.f32.mrb[0].mxu0
  %397 = vmatprep.mubr.bf16.mxu0 0
  %398 = vmatmul.mubr.bf16.gmra.mrb[0].mxu0 %v335
  %v399 = vpop.f32.mrb[0].mxu0
  %v400 = vadd.f32 %v299, %v399
  %v401 = vpop.f32.mrb[0].mxu0
  %v402 = vpop.f32.mrb[0].mxu0
  %v403 = vadd.f32 %v299, %v402
  %v404 = vpop.f32.mrb[0].mxu0
  %405 = vmatprep.mubr.bf16.mxu0 0
  %406 = vmatmul.mubr.bf16.gmra.mrb[0].mxu0 %v336
  %v407 = vpop.f32.mrb[0].mxu0
  %v408 = vadd.f32 %v299, %v407
  %v409 = vpop.f32.mrb[0].mxu0
  %v410 = vpop.f32.mrb[0].mxu0
  %v411 = vadd.f32 %v299, %v410
  %v412 = vpop.f32.mrb[0].mxu0
  %413 = vmatprep.mubr.bf16.mxu0 0
  %414 = vmatmul.mubr.bf16.gmra.mrb[0].mxu0 %v337
  %v415 = vpop.f32.mrb[0].mxu0
  %v416 = vadd.f32 %v299, %v415
  %v417 = vpop.f32.mrb[0].mxu0
  %v418 = vpop.f32.mrb[0].mxu0
  %v419 = vadd.f32 %v299, %v418
  %v420 = vpop.f32.mrb[0].mxu0
  %421 = vmatprep.mubr.bf16.mxu0 0
  %422 = vmatmul.mubr.bf16.gmra.mrb[0].mxu0 %v338
  %v423 = vpop.f32.mrb[0].mxu0
  %v424 = vadd.f32 %v299, %v423
  %v425 = vpop.f32.mrb[0].mxu0
  %v426 = vpop.f32.mrb[0].mxu0
  %v427 = vadd.f32 %v299, %v426
  %v428 = vpop.f32.mrb[0].mxu0
  %429 = vmatprep.mubr.bf16.mxu0 0
  %430 = vmatmul.mubr.bf16.gmra.mrb[0].mxu0 %v339
  %v431 = vpop.f32.mrb[0].mxu0
  %v432 = vadd.f32 %v299, %v431
  %v433 = vpop.f32.mrb[0].mxu0
  %v434 = vpop.f32.mrb[0].mxu0
  %v435 = vadd.f32 %v299, %v434
  %v436 = vpop.f32.mrb[0].mxu0
  %437 = vmatprep.mubr.bf16.mxu0 0
  %438 = vmatmul.mubr.bf16.gmra.mrb[0].mxu0 %v340
  %v439 = vpop.f32.mrb[0].mxu0
  %v440 = vadd.f32 %v299, %v439
  %v441 = vpop.f32.mrb[0].mxu0
  %v442 = vpop.f32.mrb[0].mxu0
  %v443 = vadd.f32 %v299, %v442
  %v444 = vpop.f32.mrb[0].mxu0
  %445 = vdwg.mxu0
  %v446 = vmin.f32 %v384, 20.0
  %v447 = vmin.f32 %v387, 20.0
  %v448 = vmin.f32 %v392, 20.0
  %v449 = vmin.f32 %v395, 20.0
  %v450 = vmin.f32 %v400, 20.0
  %v451 = vmin.f32 %v403, 20.0
  %v452 = vmin.f32 %v408, 20.0
  %v453 = vmin.f32 %v411, 20.0
  %v454 = vmin.f32 %v416, 20.0
  %v455 = vmin.f32 %v419, 20.0
  %v456 = vmin.f32 %v424, 20.0
  %v457 = vmin.f32 %v427, 20.0
  %v458 = vmin.f32 %v432, 20.0
  %v459 = vmin.f32 %v435, 20.0
  %v460 = vmin.f32 %v440, 20.0
  %v461 = vmin.f32 %v443, 20.0
  %v462 = vmul.f32 %v446, 1.442695
  %v463 = vpow.pop %v462
  %v464 = vmul.f32 %v447, 1.442695
  %v465 = vpow.pop %v464
  %v466 = vmul.f32 %v448, 1.442695
  %v467 = vpow.pop %v466
  %v468 = vmul.f32 %v449, 1.442695
  %v469 = vpow.pop %v468
  %v470 = vmul.f32 %v450, 1.442695
  %v471 = vpow.pop %v470
  %v472 = vmul.f32 %v451, 1.442695
  %v473 = vpow.pop %v472
  %v474 = vmul.f32 %v452, 1.442695
  %v475 = vpow.pop %v474
  %v476 = vmul.f32 %v453, 1.442695
  %v477 = vpow.pop %v476
  %v478 = vmul.f32 %v454, 1.442695
  %v479 = vpow.pop %v478
  %v480 = vmul.f32 %v455, 1.442695
  %v481 = vpow.pop %v480
  %v482 = vmul.f32 %v456, 1.442695
  %v483 = vpow.pop %v482
  %v484 = vmul.f32 %v457, 1.442695
  %v485 = vpow.pop %v484
  %v486 = vmul.f32 %v458, 1.442695
  %v487 = vpow.pop %v486
  %v488 = vmul.f32 %v459, 1.442695
  %v489 = vpow.pop %v488
  %v490 = vmul.f32 %v460, 1.442695
  %v491 = vpow.pop %v490
  %v492 = vmul.f32 %v461, 1.442695
  %v493 = vpow.pop %v492
  %v494 = vtanh.pop %v463
  %v495 = vtanh.pop %v465
  %v496 = vtanh.pop %v467
  %v497 = vtanh.pop %v469
  %v498 = vtanh.pop %v471
  %v499 = vtanh.pop %v473
  %v500 = vtanh.pop %v475
  %v501 = vtanh.pop %v477
  %v502 = vtanh.pop %v479
  %v503 = vtanh.pop %v481
  %v504 = vtanh.pop %v483
  %v505 = vtanh.pop %v485
  %v506 = vtanh.pop %v487
  %v507 = vtanh.pop %v489
  %v508 = vtanh.pop %v491
  %v509 = vtanh.pop %v493
  %v510 = vmul.f32 %v384, %v494
  %v511 = vmul.f32 %v387, %v495
  %v512 = vmul.f32 %v392, %v496
  %v513 = vmul.f32 %v395, %v497
  %v514 = vmul.f32 %v400, %v498
  %v515 = vmul.f32 %v403, %v499
  %v516 = vmul.f32 %v408, %v500
  %v517 = vmul.f32 %v411, %v501
  %v518 = vmul.f32 %v416, %v502
  %v519 = vmul.f32 %v419, %v503
  %v520 = vmul.f32 %v424, %v504
  %v521 = vmul.f32 %v427, %v505
  %v522 = vmul.f32 %v432, %v506
  %v523 = vmul.f32 %v435, %v507
  %v524 = vmul.f32 %v440, %v508
  %v525 = vmul.f32 %v443, %v509
  %v526 = vpack.c.bf16 %v511, %v510
  %v527 = vpack.c.bf16 %v513, %v512
  %v528 = vpack.c.bf16 %v515, %v514
  %v529 = vpack.c.bf16 %v517, %v516
  %v530 = vpack.c.bf16 %v519, %v518
  %v531 = vpack.c.bf16 %v521, %v520
  %v532 = vpack.c.bf16 %v523, %v522
  %v533 = vpack.c.bf16 %v525, %v524
  %v534 = vld [vmem:[%s5] sm:$0xf]
  %v535 = vld [vmem:[%s5 + $0x4] sm:$0xf]
  %v536 = vld [vmem:[%s5 + $0x8] sm:$0xf]
  %v537 = vld [vmem:[%s5 + $0xc] sm:$0xf]
  %v538 = vld [vmem:[%s5 + $0x10] sm:$0xf]
  %v539 = vld [vmem:[%s5 + $0x14] sm:$0xf]
  %v540 = vld [vmem:[%s5 + $0x18] sm:$0xf]
  %v541 = vld [vmem:[%s5 + $0x1c] sm:$0xf]
  %v542 = vld [vmem:[%s5 + $0x20] sm:$0xf]
  %v543 = vld [vmem:[%s5 + $0x24] sm:$0xf]
  %v544 = vld [vmem:[%s5 + $0x28] sm:$0xf]
  %v545 = vld [vmem:[%s5 + $0x2c] sm:$0xf]
  %v546 = vld [vmem:[%s5 + $0x30] sm:$0xf]
  %v547 = vld [vmem:[%s5 + $0x34] sm:$0xf]
  %v548 = vld [vmem:[%s5 + $0x38] sm:$0xf]
  %v549 = vld [vmem:[%s5 + $0x3c] sm:$0xf]
  %v550 = vld [vmem:[%s6] sm:$0x1]
  %v567 = vunpack.c.l.b16 %v534
  %v568 = vunpack.c.l.b16 %v535
  %v569 = vunpack.c.l.b16 %v536
  %v570 = vunpack.c.l.b16 %v537
  %v571 = vunpack.c.l.b16 %v538
  %v572 = vunpack.c.l.b16 %v539
  %v573 = vunpack.c.l.b16 %v540
  %v574 = vunpack.c.l.b16 %v541
  %v575 = vunpack.c.l.b16 %v542
  %v576 = vunpack.c.l.b16 %v543
  %v577 = vunpack.c.l.b16 %v544
  %v578 = vunpack.c.l.b16 %v545
  %v579 = vunpack.c.l.b16 %v546
  %v580 = vunpack.c.l.b16 %v547
  %v581 = vunpack.c.l.b16 %v548
  %v582 = vunpack.c.l.b16 %v549
  %v583 = vpack.c.b16 %v568, %v567
  %v584 = vpack.c.b16 %v570, %v569
  %v585 = vpack.c.b16 %v572, %v571
  %v586 = vpack.c.b16 %v574, %v573
  %v587 = vpack.c.b16 %v576, %v575
  %v588 = vpack.c.b16 %v578, %v577
  %v589 = vpack.c.b16 %v580, %v579
  %v590 = vpack.c.b16 %v582, %v581
  %599 = vmatprep.subr.bf16.mxu0 0
  %600 = vmatpush1.bf16.msra.mxu0 %v583
  %601 = vmatprep.subr.bf16.mxu0 0
  %602 = vmatpush1.bf16.msra.mxu0 %v584
  %603 = vmatprep.subr.bf16.mxu0 0
  %604 = vmatpush1.bf16.msra.mxu0 %v585
  %605 = vmatprep.subr.bf16.mxu0 0
  %606 = vmatpush1.bf16.msra.mxu0 %v586
  %607 = vmatprep.subr.bf16.mxu0 0
  %608 = vmatpush1.bf16.msra.mxu0 %v587
  %609 = vmatprep.subr.bf16.mxu0 0
  %610 = vmatpush1.bf16.msra.mxu0 %v588
  %611 = vmatprep.subr.bf16.mxu0 0
  %612 = vmatpush1.bf16.msra.mxu0 %v589
  %613 = vmatprep.subr.bf16.mxu0 0
  %614 = vmatpush1.bf16.msra.mxu0 %v590
  %615 = vmatprep.subr.bf16.mxu0 0
  %616 = vmatpush1.bf16.msra.mxu0 0
  %617 = vmatprep.subr.bf16.mxu0 0
  %618 = vmatpush1.bf16.msra.mxu0 0
  %619 = vmatprep.subr.bf16.mxu0 0
  %620 = vmatpush1.bf16.msra.mxu0 0
  %621 = vmatprep.subr.bf16.mxu0 0
  %622 = vmatpush1.bf16.msra.mxu0 0
  %623 = vmatprep.subr.bf16.mxu0 0
  %624 = vmatpush1.bf16.msra.mxu0 0
  %625 = vmatprep.subr.bf16.mxu0 0
  %626 = vmatpush1.bf16.msra.mxu0 0
  %627 = vmatprep.subr.bf16.mxu0 0
  %628 = vmatpush1.bf16.msra.mxu0 0
  %629 = vmatprep.subr.bf16.mxu0 0
  %630 = vmatpush1.bf16.msra.mxu0 0
  %631 = vmatprep.mubr.bf16.mxu0 0
  %632 = vmatmul.mubr.bf16.gmra.mrb[0].mxu0 %v526
  %v633 = vpop.f32.mrb[0].mxu0
  %v634 = vadd.f32 0.0, %v633
  %v635 = vpop.f32.mrb[0].mxu0
  %v636 = vpop.f32.mrb[0].mxu0
  %v637 = vadd.f32 0.0, %v636
  %v638 = vpop.f32.mrb[0].mxu0
  %639 = vmatprep.mubr.bf16.mxu0 0
  %640 = vmatmul.mubr.bf16.gmra.mrb[0].mxu0 %v527
  %v641 = vpop.f32.mrb[0].mxu0
  %v642 = vadd.f32 0.0, %v641
  %v643 = vpop.f32.mrb[0].mxu0
  %v644 = vpop.f32.mrb[0].mxu0
  %v645 = vadd.f32 0.0, %v644
  %v646 = vpop.f32.mrb[0].mxu0
  %647 = vmatprep.mubr.bf16.mxu0 0
  %648 = vmatmul.mubr.bf16.gmra.mrb[0].mxu0 %v528
  %v649 = vpop.f32.mrb[0].mxu0
  %v650 = vadd.f32 0.0, %v649
  %v651 = vpop.f32.mrb[0].mxu0
  %v652 = vpop.f32.mrb[0].mxu0
  %v653 = vadd.f32 0.0, %v652
  %v654 = vpop.f32.mrb[0].mxu0
  %655 = vmatprep.mubr.bf16.mxu0 0
  %656 = vmatmul.mubr.bf16.gmra.mrb[0].mxu0 %v529
  %v657 = vpop.f32.mrb[0].mxu0
  %v658 = vadd.f32 0.0, %v657
  %v659 = vpop.f32.mrb[0].mxu0
  %v660 = vpop.f32.mrb[0].mxu0
  %v661 = vadd.f32 0.0, %v660
  %v662 = vpop.f32.mrb[0].mxu0
  %663 = vmatprep.mubr.bf16.mxu0 0
  %664 = vmatmul.mubr.bf16.gmra.mrb[0].mxu0 %v530
  %v665 = vpop.f32.mrb[0].mxu0
  %v666 = vadd.f32 0.0, %v665
  %v667 = vpop.f32.mrb[0].mxu0
  %v668 = vpop.f32.mrb[0].mxu0
  %v669 = vadd.f32 0.0, %v668
  %v670 = vpop.f32.mrb[0].mxu0
  %671 = vmatprep.mubr.bf16.mxu0 0
  %672 = vmatmul.mubr.bf16.gmra.mrb[0].mxu0 %v531
  %v673 = vpop.f32.mrb[0].mxu0
  %v674 = vadd.f32 0.0, %v673
  %v675 = vpop.f32.mrb[0].mxu0
  %v676 = vpop.f32.mrb[0].mxu0
  %v677 = vadd.f32 0.0, %v676
  %v678 = vpop.f32.mrb[0].mxu0
  %679 = vmatprep.mubr.bf16.mxu0 0
  %680 = vmatmul.mubr.bf16.gmra.mrb[0].mxu0 %v532
  %v681 = vpop.f32.mrb[0].mxu0
  %v682 = vadd.f32 0.0, %v681
  %v683 = vpop.f32.mrb[0].mxu0
  %v684 = vpop.f32.mrb[0].mxu0
  %v685 = vadd.f32 0.0, %v684
  %v686 = vpop.f32.mrb[0].mxu0
  %687 = vmatprep.mubr.bf16.mxu0 0
  %688 = vmatmul.mubr.bf16.gmra.mrb[0].mxu0 %v533
  %v689 = vpop.f32.mrb[0].mxu0
  %v690 = vadd.f32 0.0, %v689
  %v691 = vpop.f32.mrb[0].mxu0
  %v692 = vpop.f32.mrb[0].mxu0
  %v693 = vadd.f32 0.0, %v692
  %v694 = vpop.f32.mrb[0].mxu0
  %695 = vdwg.mxu0
  %v696 = vpack.c.bf16 %v637, %v634
  %v697 = vpack.c.bf16 %v645, %v642
  %v698 = vpack.c.bf16 %v653, %v650
  %v699 = vpack.c.bf16 %v661, %v658
  %v700 = vpack.c.bf16 %v669, %v666
  %v701 = vpack.c.bf16 %v677, %v674
  %v702 = vpack.c.bf16 %v685, %v682
  %v703 = vpack.c.bf16 %v693, %v690
  %v705 = vlaneseq
  %v706 = vshrl.u32 %v705, 7
  %v707 = vsub.s32 0, %v706
  %v708 = vrot.slane %v550, %v707
  %710 = vmatprep.subr.bf16.mxu0 0
  %711 = vmatpush1.bf16.msra.mxu0 %v696
  %712 = vmatprep.subr.bf16.mxu0 0
  %713 = vmatpush1.bf16.msra.mxu0 %v697
  %714 = vmatprep.subr.bf16.mxu0 0
  %715 = vmatpush1.bf16.msra.mxu0 %v698
  %716 = vmatprep.subr.bf16.mxu0 0
  %717 = vmatpush1.bf16.msra.mxu0 %v699
  %718 = vmatprep.subr.bf16.mxu0 0
  %719 = vmatpush1.bf16.msra.mxu0 %v700
  %720 = vmatprep.subr.bf16.mxu0 0
  %721 = vmatpush1.bf16.msra.mxu0 %v701
  %722 = vmatprep.subr.bf16.mxu0 0
  %723 = vmatpush1.bf16.msra.mxu0 %v702
  %724 = vmatprep.subr.bf16.mxu0 0
  %725 = vmatpush1.bf16.msra.mxu0 %v703
  %726 = vmatprep.subr.bf16.mxu0 0
  %727 = vmatpush1.bf16.msra.mxu0 0
  %728 = vmatprep.subr.bf16.mxu0 0
  %729 = vmatpush1.bf16.msra.mxu0 0
  %730 = vmatprep.subr.bf16.mxu0 0
  %731 = vmatpush1.bf16.msra.mxu0 0
  %732 = vmatprep.subr.bf16.mxu0 0
  %733 = vmatpush1.bf16.msra.mxu0 0
  %734 = vmatprep.subr.bf16.mxu0 0
  %735 = vmatpush1.bf16.msra.mxu0 0
  %736 = vmatprep.subr.bf16.mxu0 0
  %737 = vmatpush1.bf16.msra.mxu0 0
  %738 = vmatprep.subr.bf16.mxu0 0
  %739 = vmatpush1.bf16.msra.mxu0 0
  %740 = vmatprep.subr.bf16.mxu0 0
  %741 = vmatpush1.bf16.msra.mxu0 0
  %742 = vmatprep.mubr.bf16.mxu0 0
  %743 = vmatmul.mubr.bf16.gmra.mrb[0].mxu0 %v333
  %v744 = vpop.f32.mrb[0].mxu0
  %v745 = vadd.f32 %v708, %v744
  %v746 = vpop.f32.mrb[0].mxu0
  %v747 = vpop.f32.mrb[0].mxu0
  %v748 = vadd.f32 %v708, %v747
  %v749 = vpop.f32.mrb[0].mxu0
  %750 = vmatprep.mubr.bf16.mxu0 0
  %751 = vmatmul.mubr.bf16.gmra.mrb[0].mxu0 %v334
  %v752 = vpop.f32.mrb[0].mxu0
  %v753 = vadd.f32 %v708, %v752
  %v754 = vpop.f32.mrb[0].mxu0
  %v755 = vpop.f32.mrb[0].mxu0
  %v756 = vadd.f32 %v708, %v755
  %v757 = vpop.f32.mrb[0].mxu0
  %758 = vmatprep.mubr.bf16.mxu0 0
  %759 = vmatmul.mubr.bf16.gmra.mrb[0].mxu0 %v335
  %v760 = vpop.f32.mrb[0].mxu0
  %v761 = vadd.f32 %v708, %v760
  %v762 = vpop.f32.mrb[0].mxu0
  %v763 = vpop.f32.mrb[0].mxu0
  %v764 = vadd.f32 %v708, %v763
  %v765 = vpop.f32.mrb[0].mxu0
  %766 = vmatprep.mubr.bf16.mxu0 0
  %767 = vmatmul.mubr.bf16.gmra.mrb[0].mxu0 %v336
  %v768 = vpop.f32.mrb[0].mxu0
  %v769 = vadd.f32 %v708, %v768
  %v770 = vpop.f32.mrb[0].mxu0
  %v771 = vpop.f32.mrb[0].mxu0
  %v772 = vadd.f32 %v708, %v771
  %v773 = vpop.f32.mrb[0].mxu0
  %774 = vmatprep.mubr.bf16.mxu0 0
  %775 = vmatmul.mubr.bf16.gmra.mrb[0].mxu0 %v337
  %v776 = vpop.f32.mrb[0].mxu0
  %v777 = vadd.f32 %v708, %v776
  %v778 = vpop.f32.mrb[0].mxu0
  %v779 = vpop.f32.mrb[0].mxu0
  %v780 = vadd.f32 %v708, %v779
  %v781 = vpop.f32.mrb[0].mxu0
  %782 = vmatprep.mubr.bf16.mxu0 0
  %783 = vmatmul.mubr.bf16.gmra.mrb[0].mxu0 %v338
  %v784 = vpop.f32.mrb[0].mxu0
  %v785 = vadd.f32 %v708, %v784
  %v786 = vpop.f32.mrb[0].mxu0
  %v787 = vpop.f32.mrb[0].mxu0
  %v788 = vadd.f32 %v708, %v787
  %v789 = vpop.f32.mrb[0].mxu0
  %790 = vmatprep.mubr.bf16.mxu0 0
  %791 = vmatmul.mubr.bf16.gmra.mrb[0].mxu0 %v339
  %v792 = vpop.f32.mrb[0].mxu0
  %v793 = vadd.f32 %v708, %v792
  %v794 = vpop.f32.mrb[0].mxu0
  %v795 = vpop.f32.mrb[0].mxu0
  %v796 = vadd.f32 %v708, %v795
  %v797 = vpop.f32.mrb[0].mxu0
  %798 = vmatprep.mubr.bf16.mxu0 0
  %799 = vmatmul.mubr.bf16.gmra.mrb[0].mxu0 %v340
  %v800 = vpop.f32.mrb[0].mxu0
  %v801 = vadd.f32 %v708, %v800
  %v802 = vpop.f32.mrb[0].mxu0
  %v803 = vpop.f32.mrb[0].mxu0
  %v804 = vadd.f32 %v708, %v803
  %v805 = vpop.f32.mrb[0].mxu0
  %806 = vdwg.mxu0
  %v807 = vmin.f32 %v745, 20.0
  %v808 = vmin.f32 %v748, 20.0
  %v809 = vmin.f32 %v753, 20.0
  %v810 = vmin.f32 %v756, 20.0
  %v811 = vmin.f32 %v761, 20.0
  %v812 = vmin.f32 %v764, 20.0
  %v813 = vmin.f32 %v769, 20.0
  %v814 = vmin.f32 %v772, 20.0
  %v815 = vmin.f32 %v777, 20.0
  %v816 = vmin.f32 %v780, 20.0
  %v817 = vmin.f32 %v785, 20.0
  %v818 = vmin.f32 %v788, 20.0
  %v819 = vmin.f32 %v793, 20.0
  %v820 = vmin.f32 %v796, 20.0
  %v821 = vmin.f32 %v801, 20.0
  %v822 = vmin.f32 %v804, 20.0
  %v823 = vmul.f32 %v807, 1.442695
  %v824 = vpow.pop %v823
  %v825 = vmul.f32 %v808, 1.442695
  %v826 = vpow.pop %v825
  %v827 = vmul.f32 %v809, 1.442695
  %v828 = vpow.pop %v827
  %v829 = vmul.f32 %v810, 1.442695
  %v830 = vpow.pop %v829
  %v831 = vmul.f32 %v811, 1.442695
  %v832 = vpow.pop %v831
  %v833 = vmul.f32 %v812, 1.442695
  %v834 = vpow.pop %v833
  %v835 = vmul.f32 %v813, 1.442695
  %v836 = vpow.pop %v835
  %v837 = vmul.f32 %v814, 1.442695
  %v838 = vpow.pop %v837
  %v839 = vmul.f32 %v815, 1.442695
  %v840 = vpow.pop %v839
  %v841 = vmul.f32 %v816, 1.442695
  %v842 = vpow.pop %v841
  %v843 = vmul.f32 %v817, 1.442695
  %v844 = vpow.pop %v843
  %v845 = vmul.f32 %v818, 1.442695
  %v846 = vpow.pop %v845
  %v847 = vmul.f32 %v819, 1.442695
  %v848 = vpow.pop %v847
  %v849 = vmul.f32 %v820, 1.442695
  %v850 = vpow.pop %v849
  %v851 = vmul.f32 %v821, 1.442695
  %v852 = vpow.pop %v851
  %v853 = vmul.f32 %v822, 1.442695
  %v854 = vpow.pop %v853
  %v855 = vtanh.pop %v824
  %v856 = vtanh.pop %v826
  %v857 = vtanh.pop %v828
  %v858 = vtanh.pop %v830
  %v859 = vtanh.pop %v832
  %v860 = vtanh.pop %v834
  %v861 = vtanh.pop %v836
  %v862 = vtanh.pop %v838
  %v863 = vtanh.pop %v840
  %v864 = vtanh.pop %v842
  %v865 = vtanh.pop %v844
  %v866 = vtanh.pop %v846
  %v867 = vtanh.pop %v848
  %v868 = vtanh.pop %v850
  %v869 = vtanh.pop %v852
  %v870 = vtanh.pop %v854
  %v871 = vmul.f32 %v745, %v855
  %v872 = vmul.f32 %v748, %v856
  %v873 = vmul.f32 %v753, %v857
  %v874 = vmul.f32 %v756, %v858
  %v875 = vmul.f32 %v761, %v859
  %v876 = vmul.f32 %v764, %v860
  %v877 = vmul.f32 %v769, %v861
  %v878 = vmul.f32 %v772, %v862
  %v879 = vmul.f32 %v777, %v863
  %v880 = vmul.f32 %v780, %v864
  %v881 = vmul.f32 %v785, %v865
  %v882 = vmul.f32 %v788, %v866
  %v883 = vmul.f32 %v793, %v867
  %v884 = vmul.f32 %v796, %v868
  %v885 = vmul.f32 %v801, %v869
  %v886 = vmul.f32 %v804, %v870
  %v887 = vpack.c.bf16 %v872, %v871
  %v888 = vpack.c.bf16 %v874, %v873
  %v889 = vpack.c.bf16 %v876, %v875
  %v890 = vpack.c.bf16 %v878, %v877
  %v891 = vpack.c.bf16 %v880, %v879
  %v892 = vpack.c.bf16 %v882, %v881
  %v893 = vpack.c.bf16 %v884, %v883
  %v894 = vpack.c.bf16 %v886, %v885
  %v895 = vld [vmem:[%s1] sm:$0xf]
  %896 = vmatprep.subr.bf16.mxu0 0
  %897 = vmatpush1.bf16.msra.mxu0 %v887
  %898 = vmatprep.subr.bf16.mxu0 0
  %899 = vmatpush1.bf16.msra.mxu0 %v888
  %900 = vmatprep.subr.bf16.mxu0 0
  %901 = vmatpush1.bf16.msra.mxu0 %v889
  %902 = vmatprep.subr.bf16.mxu0 0
  %903 = vmatpush1.bf16.msra.mxu0 %v890
  %904 = vmatprep.subr.bf16.mxu0 0
  %905 = vmatpush1.bf16.msra.mxu0 %v891
  %906 = vmatprep.subr.bf16.mxu0 0
  %907 = vmatpush1.bf16.msra.mxu0 %v892
  %908 = vmatprep.subr.bf16.mxu0 0
  %909 = vmatpush1.bf16.msra.mxu0 %v893
  %910 = vmatprep.subr.bf16.mxu0 0
  %911 = vmatpush1.bf16.msra.mxu0 %v894
  %912 = vmatprep.subr.bf16.mxu0 0
  %913 = vmatpush1.bf16.msra.mxu0 0
  %914 = vmatprep.subr.bf16.mxu0 0
  %915 = vmatpush1.bf16.msra.mxu0 0
  %916 = vmatprep.subr.bf16.mxu0 0
  %917 = vmatpush1.bf16.msra.mxu0 0
  %918 = vmatprep.subr.bf16.mxu0 0
  %919 = vmatpush1.bf16.msra.mxu0 0
  %920 = vmatprep.subr.bf16.mxu0 0
  %921 = vmatpush1.bf16.msra.mxu0 0
  %922 = vmatprep.subr.bf16.mxu0 0
  %923 = vmatpush1.bf16.msra.mxu0 0
  %924 = vmatprep.subr.bf16.mxu0 0
  %925 = vmatpush1.bf16.msra.mxu0 0
  %926 = vmatprep.subr.bf16.mxu0 0
  %927 = vmatpush1.bf16.msra.mxu0 0
  %928 = vmatprep.mubr.bf16.mxu0 0
  %929 = vmatmul.mubr.bf16.gmra.mrb[0].mxu0 %v895
  %v930 = vpop.f32.mrb[0].mxu0
  %v931 = vadd.f32 0.0, %v930
  %v932 = vpop.f32.mrb[0].mxu0
  %v933 = vpop.f32.mrb[0].mxu0
  %v934 = vpop.f32.mrb[0].mxu0
  %935 = vdwg.mxu0
  %v936 = vld [vmem:[%s7] sm:$0xf]
  %v937 = vld [vmem:[%s7 + $0x4] sm:$0xf]
  %v938 = vld [vmem:[%s7 + $0x8] sm:$0xf]
  %v939 = vld [vmem:[%s7 + $0xc] sm:$0xf]
  %v940 = vld [vmem:[%s7 + $0x10] sm:$0xf]
  %v941 = vld [vmem:[%s7 + $0x14] sm:$0xf]
  %v942 = vld [vmem:[%s7 + $0x18] sm:$0xf]
  %v943 = vld [vmem:[%s7 + $0x1c] sm:$0xf]
  %v944 = vld [vmem:[%s7 + $0x20] sm:$0xf]
  %v945 = vld [vmem:[%s7 + $0x24] sm:$0xf]
  %v946 = vld [vmem:[%s7 + $0x28] sm:$0xf]
  %v947 = vld [vmem:[%s7 + $0x2c] sm:$0xf]
  %v948 = vld [vmem:[%s7 + $0x30] sm:$0xf]
  %v949 = vld [vmem:[%s7 + $0x34] sm:$0xf]
  %v950 = vld [vmem:[%s7 + $0x38] sm:$0xf]
  %v951 = vld [vmem:[%s7 + $0x3c] sm:$0xf]
  %v952 = vld [vmem:[%s8] sm:$0x1]
  %v953 = vpack.c.bf16 %v931, %v931
  %v955 = vlaneseq
  %v956 = vshrl.u32 %v955, 7
  %v957 = vsub.s32 0, %v956
  %v958 = vrot.slane %v952, %v957
  %v976 = vunpack.c.l.b16 %v936
  %v977 = vunpack.c.l.b16 %v937
  %v978 = vunpack.c.l.b16 %v938
  %v979 = vunpack.c.l.b16 %v939
  %v980 = vunpack.c.l.b16 %v940
  %v981 = vunpack.c.l.b16 %v941
  %v982 = vunpack.c.l.b16 %v942
  %v983 = vunpack.c.l.b16 %v943
  %v984 = vunpack.c.l.b16 %v944
  %v985 = vunpack.c.l.b16 %v945
  %v986 = vunpack.c.l.b16 %v946
  %v987 = vunpack.c.l.b16 %v947
  %v988 = vunpack.c.l.b16 %v948
  %v989 = vunpack.c.l.b16 %v949
  %v990 = vunpack.c.l.b16 %v950
  %v991 = vunpack.c.l.b16 %v951
  %v992 = vpack.c.b16 %v977, %v976
  %v993 = vpack.c.b16 %v979, %v978
  %v994 = vpack.c.b16 %v981, %v980
  %v995 = vpack.c.b16 %v983, %v982
  %v996 = vpack.c.b16 %v985, %v984
  %v997 = vpack.c.b16 %v987, %v986
  %v998 = vpack.c.b16 %v989, %v988
  %v999 = vpack.c.b16 %v991, %v990
  %1008 = vmatprep.subr.bf16.mxu0 0
  %1009 = vmatpush1.bf16.msra.mxu0 %v992
  %1010 = vmatprep.subr.bf16.mxu0 0
  %1011 = vmatpush1.bf16.msra.mxu0 %v993
  %1012 = vmatprep.subr.bf16.mxu0 0
  %1013 = vmatpush1.bf16.msra.mxu0 %v994
  %1014 = vmatprep.subr.bf16.mxu0 0
  %1015 = vmatpush1.bf16.msra.mxu0 %v995
  %1016 = vmatprep.subr.bf16.mxu0 0
  %1017 = vmatpush1.bf16.msra.mxu0 %v996
  %1018 = vmatprep.subr.bf16.mxu0 0
  %1019 = vmatpush1.bf16.msra.mxu0 %v997
  %1020 = vmatprep.subr.bf16.mxu0 0
  %1021 = vmatpush1.bf16.msra.mxu0 %v998
  %1022 = vmatprep.subr.bf16.mxu0 0
  %1023 = vmatpush1.bf16.msra.mxu0 %v999
  %1024 = vmatprep.subr.bf16.mxu0 0
  %1025 = vmatpush1.bf16.msra.mxu0 0
  %1026 = vmatprep.subr.bf16.mxu0 0
  %1027 = vmatpush1.bf16.msra.mxu0 0
  %1028 = vmatprep.subr.bf16.mxu0 0
  %1029 = vmatpush1.bf16.msra.mxu0 0
  %1030 = vmatprep.subr.bf16.mxu0 0
  %1031 = vmatpush1.bf16.msra.mxu0 0
  %1032 = vmatprep.subr.bf16.mxu0 0
  %1033 = vmatpush1.bf16.msra.mxu0 0
  %1034 = vmatprep.subr.bf16.mxu0 0
  %1035 = vmatpush1.bf16.msra.mxu0 0
  %1036 = vmatprep.subr.bf16.mxu0 0
  %1037 = vmatpush1.bf16.msra.mxu0 0
  %1038 = vmatprep.subr.bf16.mxu0 0
  %1039 = vmatpush1.bf16.msra.mxu0 0
  %1040 = vmatprep.mubr.bf16.mxu0 0
  %1041 = vmatmul.mubr.bf16.gmra.mrb[0].mxu0 %v953
  %v1042 = vpop.f32.mrb[0].mxu0
  %v1043 = vadd.f32 %v958, %v1042
  %v1044 = vpop.f32.mrb[0].mxu0
  %v1045 = vpop.f32.mrb[0].mxu0
  %v1046 = vpop.f32.mrb[0].mxu0
  %1047 = vdwg.mxu0
  %v1048 = vmin.f32 %v1043, 20.0
  %v1049 = vmul.f32 %v1048, 1.442695
  %v1050 = vpow.pop %v1049
  %v1051 = vtanh.pop %v1050
  %v1052 = vmul.f32 %v1043, %v1051
  %v1053 = vld [vmem:[%s9] sm:$0xf]
  %v1054 = vld [vmem:[%s9 + $0x4] sm:$0xf]
  %v1055 = vld [vmem:[%s9 + $0x8] sm:$0xf]
  %v1056 = vld [vmem:[%s9 + $0xc] sm:$0xf]
  %v1057 = vld [vmem:[%s9 + $0x10] sm:$0xf]
  %v1058 = vld [vmem:[%s9 + $0x14] sm:$0xf]
  %v1059 = vld [vmem:[%s9 + $0x18] sm:$0xf]
  %v1060 = vld [vmem:[%s9 + $0x1c] sm:$0xf]
  %v1061 = vld [vmem:[%s9 + $0x20] sm:$0xf]
  %v1062 = vld [vmem:[%s9 + $0x24] sm:$0xf]
  %v1063 = vld [vmem:[%s9 + $0x28] sm:$0xf]
  %v1064 = vld [vmem:[%s9 + $0x2c] sm:$0xf]
  %v1065 = vld [vmem:[%s9 + $0x30] sm:$0xf]
  %v1066 = vld [vmem:[%s9 + $0x34] sm:$0xf]
  %v1067 = vld [vmem:[%s9 + $0x38] sm:$0xf]
  %v1068 = vld [vmem:[%s9 + $0x3c] sm:$0xf]
  %v1069 = vld [vmem:[%s10] sm:$0x1]
  %v1070 = vpack.c.bf16 %v1052, %v1052
  %v1072 = vlaneseq
  %v1073 = vshrl.u32 %v1072, 7
  %v1074 = vsub.s32 0, %v1073
  %v1075 = vrot.slane %v1069, %v1074
  %v1093 = vunpack.c.l.b16 %v1053
  %v1094 = vunpack.c.l.b16 %v1054
  %v1095 = vunpack.c.l.b16 %v1055
  %v1096 = vunpack.c.l.b16 %v1056
  %v1097 = vunpack.c.l.b16 %v1057
  %v1098 = vunpack.c.l.b16 %v1058
  %v1099 = vunpack.c.l.b16 %v1059
  %v1100 = vunpack.c.l.b16 %v1060
  %v1101 = vunpack.c.l.b16 %v1061
  %v1102 = vunpack.c.l.b16 %v1062
  %v1103 = vunpack.c.l.b16 %v1063
  %v1104 = vunpack.c.l.b16 %v1064
  %v1105 = vunpack.c.l.b16 %v1065
  %v1106 = vunpack.c.l.b16 %v1066
  %v1107 = vunpack.c.l.b16 %v1067
  %v1108 = vunpack.c.l.b16 %v1068
  %v1109 = vpack.c.b16 %v1094, %v1093
  %v1110 = vpack.c.b16 %v1096, %v1095
  %v1111 = vpack.c.b16 %v1098, %v1097
  %v1112 = vpack.c.b16 %v1100, %v1099
  %v1113 = vpack.c.b16 %v1102, %v1101
  %v1114 = vpack.c.b16 %v1104, %v1103
  %v1115 = vpack.c.b16 %v1106, %v1105
  %v1116 = vpack.c.b16 %v1108, %v1107
  %1125 = vmatprep.subr.bf16.mxu0 0
  %1126 = vmatpush1.bf16.msra.mxu0 %v1109
  %1127 = vmatprep.subr.bf16.mxu0 0
  %1128 = vmatpush1.bf16.msra.mxu0 %v1110
  %1129 = vmatprep.subr.bf16.mxu0 0
  %1130 = vmatpush1.bf16.msra.mxu0 %v1111
  %1131 = vmatprep.subr.bf16.mxu0 0
  %1132 = vmatpush1.bf16.msra.mxu0 %v1112
  %1133 = vmatprep.subr.bf16.mxu0 0
  %1134 = vmatpush1.bf16.msra.mxu0 %v1113
  %1135 = vmatprep.subr.bf16.mxu0 0
  %1136 = vmatpush1.bf16.msra.mxu0 %v1114
  %1137 = vmatprep.subr.bf16.mxu0 0
  %1138 = vmatpush1.bf16.msra.mxu0 %v1115
  %1139 = vmatprep.subr.bf16.mxu0 0
  %1140 = vmatpush1.bf16.msra.mxu0 %v1116
  %1141 = vmatprep.subr.bf16.mxu0 0
  %1142 = vmatpush1.bf16.msra.mxu0 0
  %1143 = vmatprep.subr.bf16.mxu0 0
  %1144 = vmatpush1.bf16.msra.mxu0 0
  %1145 = vmatprep.subr.bf16.mxu0 0
  %1146 = vmatpush1.bf16.msra.mxu0 0
  %1147 = vmatprep.subr.bf16.mxu0 0
  %1148 = vmatpush1.bf16.msra.mxu0 0
  %1149 = vmatprep.subr.bf16.mxu0 0
  %1150 = vmatpush1.bf16.msra.mxu0 0
  %1151 = vmatprep.subr.bf16.mxu0 0
  %1152 = vmatpush1.bf16.msra.mxu0 0
  %1153 = vmatprep.subr.bf16.mxu0 0
  %1154 = vmatpush1.bf16.msra.mxu0 0
  %1155 = vmatprep.subr.bf16.mxu0 0
  %1156 = vmatpush1.bf16.msra.mxu0 0
  %1157 = vmatprep.mubr.bf16.mxu0 0
  %1158 = vmatmul.mubr.bf16.gmra.mrb[0].mxu0 %v1070
  %v1159 = vpop.f32.mrb[0].mxu0
  %v1160 = vadd.f32 %v1075, %v1159
  %v1161 = vpop.f32.mrb[0].mxu0
  %v1162 = vpop.f32.mrb[0].mxu0
  %v1163 = vpop.f32.mrb[0].mxu0
  %1164 = vdwg.mxu0
  %v1165 = vmin.f32 %v1160, 20.0
  %v1166 = vmul.f32 %v1165, 1.442695
  %v1167 = vpow.pop %v1166
  %v1168 = vtanh.pop %v1167
  %v1169 = vmul.f32 %v1160, %v1168
  %v1170 = vld [vmem:[%s11] sm:$0xf]
  %v1171 = vld [vmem:[%s11 + $0x4] sm:$0xf]
  %v1172 = vld [vmem:[%s11 + $0x8] sm:$0xf]
  %v1173 = vld [vmem:[%s11 + $0xc] sm:$0xf]
  %v1174 = vld [vmem:[%s11 + $0x10] sm:$0xf]
  %v1175 = vld [vmem:[%s11 + $0x14] sm:$0xf]
  %v1176 = vld [vmem:[%s11 + $0x18] sm:$0xf]
  %v1177 = vld [vmem:[%s11 + $0x1c] sm:$0xf]
  %v1178 = vld [vmem:[%s11 + $0x20] sm:$0xf]
  %v1179 = vld [vmem:[%s11 + $0x24] sm:$0xf]
  %v1180 = vld [vmem:[%s11 + $0x28] sm:$0xf]
  %v1181 = vld [vmem:[%s11 + $0x2c] sm:$0xf]
  %v1182 = vld [vmem:[%s11 + $0x30] sm:$0xf]
  %v1183 = vld [vmem:[%s11 + $0x34] sm:$0xf]
  %v1184 = vld [vmem:[%s11 + $0x38] sm:$0xf]
  %v1185 = vld [vmem:[%s11 + $0x3c] sm:$0xf]
  %v1186 = vld [vmem:[%s12] sm:$0x1]
  %v1187 = vpack.c.bf16 %v1169, %v1169
  %v1189 = vlaneseq
  %v1190 = vshrl.u32 %v1189, 7
  %v1191 = vsub.s32 0, %v1190
  %v1192 = vrot.slane %v1186, %v1191
  %v1210 = vunpack.c.l.b16 %v1170
  %v1211 = vunpack.c.l.b16 %v1171
  %v1212 = vunpack.c.l.b16 %v1172
  %v1213 = vunpack.c.l.b16 %v1173
  %v1214 = vunpack.c.l.b16 %v1174
  %v1215 = vunpack.c.l.b16 %v1175
  %v1216 = vunpack.c.l.b16 %v1176
  %v1217 = vunpack.c.l.b16 %v1177
  %v1218 = vunpack.c.l.b16 %v1178
  %v1219 = vunpack.c.l.b16 %v1179
  %v1220 = vunpack.c.l.b16 %v1180
  %v1221 = vunpack.c.l.b16 %v1181
  %v1222 = vunpack.c.l.b16 %v1182
  %v1223 = vunpack.c.l.b16 %v1183
  %v1224 = vunpack.c.l.b16 %v1184
  %v1225 = vunpack.c.l.b16 %v1185
  %v1226 = vpack.c.b16 %v1211, %v1210
  %v1227 = vpack.c.b16 %v1213, %v1212
  %v1228 = vpack.c.b16 %v1215, %v1214
  %v1229 = vpack.c.b16 %v1217, %v1216
  %v1230 = vpack.c.b16 %v1219, %v1218
  %v1231 = vpack.c.b16 %v1221, %v1220
  %v1232 = vpack.c.b16 %v1223, %v1222
  %v1233 = vpack.c.b16 %v1225, %v1224
  %1242 = vmatprep.subr.bf16.mxu0 0
  %1243 = vmatpush1.bf16.msra.mxu0 %v1226
  %1244 = vmatprep.subr.bf16.mxu0 0
  %1245 = vmatpush1.bf16.msra.mxu0 %v1227
  %1246 = vmatprep.subr.bf16.mxu0 0
  %1247 = vmatpush1.bf16.msra.mxu0 %v1228
  %1248 = vmatprep.subr.bf16.mxu0 0
  %1249 = vmatpush1.bf16.msra.mxu0 %v1229
  %1250 = vmatprep.subr.bf16.mxu0 0
  %1251 = vmatpush1.bf16.msra.mxu0 %v1230
  %1252 = vmatprep.subr.bf16.mxu0 0
  %1253 = vmatpush1.bf16.msra.mxu0 %v1231
  %1254 = vmatprep.subr.bf16.mxu0 0
  %1255 = vmatpush1.bf16.msra.mxu0 %v1232
  %1256 = vmatprep.subr.bf16.mxu0 0
  %1257 = vmatpush1.bf16.msra.mxu0 %v1233
  %1258 = vmatprep.subr.bf16.mxu0 0
  %1259 = vmatpush1.bf16.msra.mxu0 0
  %1260 = vmatprep.subr.bf16.mxu0 0
  %1261 = vmatpush1.bf16.msra.mxu0 0
  %1262 = vmatprep.subr.bf16.mxu0 0
  %1263 = vmatpush1.bf16.msra.mxu0 0
  %1264 = vmatprep.subr.bf16.mxu0 0
  %1265 = vmatpush1.bf16.msra.mxu0 0
  %1266 = vmatprep.subr.bf16.mxu0 0
  %1267 = vmatpush1.bf16.msra.mxu0 0
  %1268 = vmatprep.subr.bf16.mxu0 0
  %1269 = vmatpush1.bf16.msra.mxu0 0
  %1270 = vmatprep.subr.bf16.mxu0 0
  %1271 = vmatpush1.bf16.msra.mxu0 0
  %1272 = vmatprep.subr.bf16.mxu0 0
  %1273 = vmatpush1.bf16.msra.mxu0 0
  %1274 = vmatprep.mubr.bf16.mxu0 0
  %1275 = vmatmul.mubr.bf16.gmra.mrb[0].mxu0 %v1187
  %v1276 = vpop.f32.mrb[0].mxu0
  %v1277 = vadd.f32 %v1192, %v1276
  %v1278 = vpop.f32.mrb[0].mxu0
  %v1279 = vpop.f32.mrb[0].mxu0
  %v1280 = vpop.f32.mrb[0].mxu0
  %1281 = vdwg.mxu0
  %1282 = vst [vmem:[%s13] sm:$0xff] %v1277
  // Predicated region
  $region54: #{graph_conv_model_forward.1} parent=0 // pred_check
    _
  $region55: #{graph_conv_model_forward.1} parent=0 // pred_check_branch
    %1284 = sbr.rel (0) target = $region57
  $region56: #{graph_conv_model_forward.1} parent=0 // pred_region
    _
  $region57: #{graph_conv_model_forward.1} parent=0 // pred_fallthru
    _
  // Predicated region
  $region58: #{graph_conv_model_forward.1} parent=0 // pred_check
    _
  $region59: #{graph_conv_model_forward.1} parent=0 // pred_check_branch
    %1286 = sbr.rel (0) target = $region61
  $region60: #{graph_conv_model_forward.1} parent=0 // pred_region
    _
  $region61: #{graph_conv_model_forward.1} parent=0 // pred_fallthru
    _

</llo_original>
